<compile_context>
chip_gen: v5e
topology: v5e:2x2
jax: 0.10.0
libtpu: 0.0.40
codegen_flags: <defaults>
</compile_context>

<pallas_src>
import jax
import jax.numpy as jnp
from jax.experimental import pallas as pl
from jax.experimental.pallas import tpu as pltpu

_LANE = 128


def _round_up(x, m):
    return ((x + m - 1) // m) * m


def _default_tiles():
    """Per-generation (TN, TE) tile sizes: TN over vertices, TE over edges."""
    try:
        kind = jax.devices()[0].device_kind.lower()
    except Exception:
        kind = ""
    if "v6" in kind:
        return 512, 2048      # 128 MiB VMEM, 2x256x256 MXU -> big 256-multiple tiles
    if "v5" in kind:
        return 256, 1024      # 4x128x128 MXU, single vst slot -> 128-aligned tiles
    return 256, 1024          # v7x (64 MiB VMEM) and anything else: conservative


def _cbar_kernel(dst_ref, c_ref, out_ref, acc_ref):
    # dst_ref: (1, TE)  int32   receiving-vertex index of each edge in this E-tile
    # c_ref:   (TE, Dp) bf16    edge features (pre-sliced / padded / cast on host)
    # out_ref: (TN, Dp) f32     aggregated edge features for this vertex tile
    # acc_ref: (TN, Dp) f32     VMEM accumulator, resident across the E (reduction) axis
    i = pl.program_id(0)        # vertex tile (parallel)
    k = pl.program_id(1)        # edge tile   (reduction)

    @pl.when(k == 0)
    def _init():
        acc_ref[...] = jnp.zeros_like(acc_ref)

    tn = acc_ref.shape[0]
    te = c_ref.shape[0]

    # Local one-hot incidence: onehot[v, e] = 1 iff edge e targets vertex i*TN + v.
    # Compare in int32 (v5e has no bf16 VPU); cast to bf16 only for the MXU (exact 0/1).
    dst_local = dst_ref[...] - i * tn                              # (1, TE)
    row_ids = jax.lax.broadcasted_iota(jnp.int32, (tn, te), 0)     # (TN, TE)
    onehot = (row_ids == dst_local).astype(c_ref.dtype)            # (TN, TE)

    # Edge -> vertex scatter-sum as an MXU matmul with f32 accumulation.
    acc_ref[...] += jnp.dot(onehot, c_ref[...],
                            preferred_element_type=jnp.float32)

    @pl.when(k == pl.num_programs(1) - 1)
    def _finalize():
        out_ref[...] = acc_ref[...]


def vertex_update(vertex_attr, edgeij_pair, edge_attr, g=None, batch=None, *,
                  tn=None, te=None, compute_dtype=jnp.bfloat16):
    """Pallas implementation of VertexUpdate.forward (scatter-sum aggregation)."""
    N, D = vertex_attr.shape
    E, F = edge_attr.shape
    if F < 1 + D:
        raise ValueError(f"edge_attr needs at least {1 + D} features, got {F}")

    d_tn, d_te = _default_tiles()
    tn = tn or d_tn
    te = te or d_te
    tn = min(tn, _round_up(N, 8))         # keep sublane-aligned tiles
    te = min(te, _round_up(E, _LANE))     # keep lane-aligned edge tiles
    Np = _round_up(N, tn)
    Ep = _round_up(E, te)
    Dp = _round_up(D, _LANE)              # pad feature dim to full lanes (MXU + lane-dense stores)

    # Host-side prep (kept out of the kernel): the non-lane-aligned column slice,
    # zero-padding of D -> Dp, and the bf16 cast. Padded edges get dst = -1 and
    # zero features, so they contribute nothing.
    c = edge_attr[:, 1:1 + D].astype(compute_dtype)
    c = jnp.pad(c, ((0, Ep - E), (0, Dp - D)))
    dst = edgeij_pair[:, 0].astype(jnp.int32)
    dst = jnp.pad(dst, (0, Ep - E), constant_values=-1).reshape(1, Ep)

    grid = (Np // tn, Ep // te)
    itemsize = jnp.dtype(compute_dtype).itemsize
    cost = pl.CostEstimate(
        flops=2 * Np * Ep * Dp,
        transcendentals=0,
        bytes_accessed=grid[0] * Ep * (Dp * itemsize + 4) + Np * Dp * 4,
    )

    cbar_padded = pl.pallas_call(
        _cbar_kernel,
        out_shape=jax.ShapeDtypeStruct((Np, Dp), jnp.float32),
        grid_spec=pltpu.PrefetchScalarGridSpec(
            num_scalar_prefetch=0,
            grid=grid,
            in_specs=[
                pl.BlockSpec((1, te), lambda i, k: (0, k)),    # edge destinations
                pl.BlockSpec((te, Dp), lambda i, k: (k, 0)),   # edge features
            ],
            out_specs=pl.BlockSpec((tn, Dp), lambda i, k: (i, 0)),
            scratch_shapes=[pltpu.VMEM((tn, Dp), jnp.float32)],
        ),
        compiler_params=pltpu.CompilerParams(
            dimension_semantics=("parallel", "arbitrary"),
            vmem_limit_bytes=32 * 1024 * 1024,
        ),
        cost_estimate=cost,
    )(dst, c)

    cbar = cbar_padded[:N, :D].astype(vertex_attr.dtype)
    # Concat in the wrapper: avoids a D-wide masked store into a 2D-wide output
    # and the x passthrough HBM->VMEM->HBM memcpy inside the kernel.
    return jnp.concatenate([vertex_attr, cbar], axis=1)


if __name__ == "__main__":
    key = jax.random.PRNGKey(0)
    k1, k2, k3 = jax.random.split(key, 3)

    N = 16   # vertices
    D = 8    # vertex feature dim
    E = 32   # edges
    F = 12   # edge feature dim (>= 1 + D)

    vertex_attr = jax.random.normal(k1, (N, D), dtype=jnp.float32)
    edge_attr = jax.random.normal(k2, (E, F), dtype=jnp.float32)
    edgeij_pair = jax.random.randint(k3, (E, 2), 0, N, dtype=jnp.int32)

    out = vertex_update(vertex_attr, edgeij_pair, edge_attr, None, None)
    out = jax.block_until_ready(out)
    assert out.shape == (N, 2 * D)

    # 1) Scatter logic is exact: compare against a reference fed the same
    #    bf16-quantized edge features (one-hot is exact in bf16, accumulation f32).
    c_q = edge_attr[:, 1:1 + D].astype(jnp.bfloat16).astype(jnp.float32)
    cbar_q = jax.ops.segment_sum(c_q, edgeij_pair[:, 0], num_segments=N)
    ref_q = jnp.concatenate([vertex_attr, cbar_q], axis=1)
    assert jnp.allclose(out, ref_q, atol=1e-5, rtol=1e-5), "scatter-sum mismatch"

    # 2) Against full f32 module semantics (tolerance covers the bf16 feature cast).
    cbar_f = jax.ops.segment_sum(edge_attr[:, 1:1 + D], edgeij_pair[:, 0],
                                 num_segments=N)
    ref_f = jnp.concatenate([vertex_attr, cbar_f], axis=1)
    assert jnp.allclose(out, ref_f, atol=5e-2, rtol=5e-2), "numerics drift"

    print("KERNEL_OK")
</pallas_src>

<mosaic_0001>
module attributes {stable_mosaic.version = 11 : i64} {
  func.func @_cbar_kernel(%arg0: i32, %arg1: i32, %arg2: memref<1x128xi32, #tpu.memory_space<vmem>>, %arg3: memref<128x128xbf16, #tpu.memory_space<vmem>>, %arg4: memref<16x128xf32, #tpu.memory_space<vmem>>, %arg5: memref<16x128xf32, #tpu.memory_space<vmem>>) attributes {dimension_semantics = [#tpu.dimension_semantics<parallel>, #tpu.dimension_semantics<arbitrary>], iteration_bounds = array<i64: 1, 1>, scalar_prefetch = 0 : i64, scratch_operands = 1 : i64, tpu.core_type = #tpu.core_type<tc>, window_params = [{transform_indices = @transform_0, window_bounds = array<i64: 1, 128>}, {transform_indices = @transform_1, window_bounds = array<i64: 128, 128>}, {transform_indices = @transform_2, window_bounds = array<i64: 16, 128>}]} {
    %c0_i32 = arith.constant 0 : i32
    %0 = arith.cmpi eq, %arg1, %c0_i32 : i32
    %1 = arith.extui %0 : i1 to i32
    %c0_i32_0 = arith.constant 0 : i32
    %2 = arith.cmpi ne, %1, %c0_i32_0 : i32
    scf.if %2 {
      %cst_10 = arith.constant 0.000000e+00 : f32
      %21 = vector.broadcast %cst_10 : f32 to vector<16x128xf32>
      %c0_11 = arith.constant 0 : index
      %c0_12 = arith.constant 0 : index
      %22 = vector.load %arg5[%c0_11, %c0_12] : memref<16x128xf32, #tpu.memory_space<vmem>>, vector<16x128xf32>
      tpu.vector_store %arg5[%c0_11, %c0_12], %21 {strides = array<i32>} : memref<16x128xf32, #tpu.memory_space<vmem>>, vector<16x128xf32>,
    } else {
    }
    %c0 = arith.constant 0 : index
    %c0_1 = arith.constant 0 : index
    %3 = vector.load %arg2[%c0, %c0_1] : memref<1x128xi32, #tpu.memory_space<vmem>>, vector<1x128xi32>
    %c16_i32 = arith.constant 16 : i32
    %4 = arith.muli %arg0, %c16_i32 : i32
    %5 = vector.broadcast %4 : i32 to vector<1x128xi32>
    %6 = arith.subi %3, %5 : vector<1x128xi32>
    %7 = tpu.iota {dimensions = array<i32: 0>} : vector<16x128xi32>
    %8 = vector.broadcast %6 : vector<1x128xi32> to vector<16x128xi32>
    %9 = arith.cmpi eq, %7, %8 : vector<16x128xi32>
    %10 = arith.extui %9 : vector<16x128xi1> to vector<16x128xi32>
    %11 = arith.sitofp %10 : vector<16x128xi32> to vector<16x128xf32>
    %12 = arith.truncf %11 : vector<16x128xf32> to vector<16x128xbf16>
    %c0_2 = arith.constant 0 : index
    %c0_3 = arith.constant 0 : index
    %13 = vector.load %arg5[%c0_2, %c0_3] : memref<16x128xf32, #tpu.memory_space<vmem>>, vector<16x128xf32>
    %c0_4 = arith.constant 0 : index
    %c0_5 = arith.constant 0 : index
    %14 = vector.load %arg3[%c0_4, %c0_5] : memref<128x128xbf16, #tpu.memory_space<vmem>>, vector<128x128xbf16>
    %cst = arith.constant dense<0.000000e+00> : vector<16x128xf32>
    %15 = tpu.matmul %12, %14, %cst {dimension_numbers = #tpu.dot_dimension_numbers<[1], [0], [0], [1], [0, 0, 1, 1], [], []>} : vector<16x128xbf16>, vector<128x128xbf16>, vector<16x128xf32> -> vector<16x128xf32>
    %16 = arith.addf %13, %15 : vector<16x128xf32>
    %c0_6 = arith.constant 0 : index
    %c0_7 = arith.constant 0 : index
    %17 = vector.load %arg5[%c0_6, %c0_7] : memref<16x128xf32, #tpu.memory_space<vmem>>, vector<16x128xf32>
    tpu.vector_store %arg5[%c0_6, %c0_7], %16 {strides = array<i32>} : memref<16x128xf32, #tpu.memory_space<vmem>>, vector<16x128xf32>,
    %c0_i32_8 = arith.constant 0 : i32
    %18 = arith.cmpi eq, %arg1, %c0_i32_8 : i32
    %19 = arith.extui %18 : i1 to i32
    %c0_i32_9 = arith.constant 0 : i32
    %20 = arith.cmpi ne, %19, %c0_i32_9 : i32
    scf.if %20 {
      %c0_10 = arith.constant 0 : index
      %c0_11 = arith.constant 0 : index
      %21 = vector.load %arg5[%c0_10, %c0_11] : memref<16x128xf32, #tpu.memory_space<vmem>>, vector<16x128xf32>
      %c0_12 = arith.constant 0 : index
      %c0_13 = arith.constant 0 : index
      %22 = vector.load %arg4[%c0_12, %c0_13] : memref<16x128xf32, #tpu.memory_space<vmem>>, vector<16x128xf32>
      tpu.vector_store %arg4[%c0_12, %c0_13], %21 {strides = array<i32>} : memref<16x128xf32, #tpu.memory_space<vmem>>, vector<16x128xf32>,
    } else {
    }
    return
  }
  func.func @transform_0(%arg0: i32, %arg1: i32) -> (i32, i32) {
    %c0_i32 = arith.constant 0 : i32
    %c0_i32_0 = arith.constant 0 : i32
    return %c0_i32, %arg1 : i32, i32
  }
  func.func @transform_1(%arg0: i32, %arg1: i32) -> (i32, i32) {
    %c0_i32 = arith.constant 0 : i32
    %c0_i32_0 = arith.constant 0 : i32
    return %arg1, %c0_i32 : i32, i32
  }
  func.func @transform_2(%arg0: i32, %arg1: i32) -> (i32, i32) {
    %c0_i32 = arith.constant 0 : i32
    %c0_i32_0 = arith.constant 0 : i32
    return %arg0, %c0_i32 : i32, i32
  }
}

</mosaic_0001>

<llo_original>
// kernel: tpu_custom_call.1
$region0: #{tpu_custom_call.1}
  #allocation0 [shape = 'u32[]', space=smem, size = 0x4, offset = 0x4, fixed_abs, tag = 'smem constant byte address 0x4 - core index']
  #allocation1 [shape = 'u32[72,128]{1,0:T(1,128)}', space=vmem, size = 0x9000, scoped, tag = 'internal scratch']
  #allocation2 [shape = 'f32[16,128]{1,0:T(8,128)}', space=vmem, size = 0x2000, scoped, tag = 'scratch operand']
  %s0 = inlined_call_operand.hbm [shape: s32[1,128], index: 0, kind: input, shape index: {}]
  %s1 = inlined_call_operand.hbm [shape: bf16[128,128], index: 1, kind: input, shape index: {}]
  %s2 = inlined_call_operand.hbm [shape: f32[16,128], index: 2, kind: output, shape index: {}]
  %s3 = sld [smem:[#allocation0]]
  $region34: #{tpu_custom_call.1} parent=0
    _
  %s5 = ssub.s32 1, %s3
  %s6 = scalar_select 0, %s5, %s3
  $region1: #{tpu_custom_call.1} parent=0
    #allocation3 [shape = 'u8[512]{0}', space=vmem, size = 0x400, scoped, tag = 'input window, operand 0, single buffered']
    #allocation4 [shape = 's32[1]{0}', space=sflag, size = 0x4, scoped, tag = 'scoped memory for tpu_custom_call.1']
    #allocation5 [shape = 's32[1]{0}', space=sflag, size = 0x4, scoped, tag = 'scoped memory for tpu_custom_call.1']
    #allocation6 [shape = 'u8[32768]{0}', space=vmem, size = 0x8000, scoped, tag = 'input window, operand 1, single buffered']
    #allocation7 [shape = 's32[1]{0}', space=sflag, size = 0x4, scoped, tag = 'scoped memory for tpu_custom_call.1']
    #allocation8 [shape = 'u8[8192]{0}', space=vmem, size = 0x2000, scoped, tag = 'output window, operand 0, single buffered']
    %7 = vsyncpa [#allocation4], 0
    %8 = vsyncpa [#allocation7], 0
    %9 = vsyncpa [#allocation5], 0
    // Predicated region
    $region2: #{tpu_custom_call.1} parent=1 // pred_check
      _
    $region3: #{tpu_custom_call.1} parent=1 // pred_check_branch
      %11 = sbr.rel (0) target = $region5
    $region4: #{tpu_custom_call.1} parent=1 // pred_region
      %13 = vsyncadd [#allocation4], 0
      %s15 = sshll.u32 %s0, 4
      %s16 = int_to_ptr.hbm [resolvable:$true] %s15
      %s17 = sshll.u32 [#allocation3], 4
      %s18 = int_to_ptr.vmem [resolvable:$true] %s17
      %20 = dma.hbm_to_vmem [thread:$0]  %s16, 16, %s18, [#allocation4]
    $region5: #{tpu_custom_call.1} parent=1 // pred_fallthru
      _
    // Predicated region
    $region6: #{tpu_custom_call.1} parent=1 // pred_check
      _
    $region7: #{tpu_custom_call.1} parent=1 // pred_check_branch
      %22 = sbr.rel (0) target = $region9
    $region8: #{tpu_custom_call.1} parent=1 // pred_region
      %24 = vsyncadd [#allocation7], 0
      %s25 = sshll.u32 %s1, 4
      %s26 = int_to_ptr.hbm [resolvable:$true] %s25
      %s27 = sshll.u32 [#allocation6], 4
      %s28 = int_to_ptr.vmem [resolvable:$true] %s27
      %33 = dma.hbm_to_vmem [thread:$0]  %s26, 1024, %s28, [#allocation7], 64, 64, 4
    $region9: #{tpu_custom_call.1} parent=1 // pred_fallthru
      _
    // Predicated region
    $region10: #{tpu_custom_call.1} parent=1 // pred_check
      _
    $region11: #{tpu_custom_call.1} parent=1 // pred_check_branch
      %35 = sbr.rel (0) target = $region13
    $region12: #{tpu_custom_call.1} parent=1 // pred_region
      %37 = dma.done [#allocation4], 16
    $region13: #{tpu_custom_call.1} parent=1 // pred_fallthru
      _
    // Predicated region
    $region14: #{tpu_custom_call.1} parent=1 // pred_check
      _
    $region15: #{tpu_custom_call.1} parent=1 // pred_check_branch
      %39 = sbr.rel (0) target = $region17
    $region16: #{tpu_custom_call.1} parent=1 // pred_region
      %41 = dma.done [#allocation7], 1024
    $region17: #{tpu_custom_call.1} parent=1 // pred_fallthru
      _
    %p42 = scmp.eq.s32.totalorder 0, 0
    // Predicated region
    $region18: #{tpu_custom_call.1} parent=1 // pred_check
      %p43 = pneg %p42
    $region19: #{tpu_custom_call.1} parent=1 // pred_check_branch
      %45 = sbr.rel (%p43) target = $region21
    $region20: #{tpu_custom_call.1} parent=1 // pred_region
      %46 = vst [vmem:[#allocation2] sm:$0xff] 0.0
      %47 = vst [vmem:[#allocation2 + $0x8] sm:$0xff] 0.0
    $region21: #{tpu_custom_call.1} parent=1 // pred_fallthru
      _
    %v48 = vld [vmem:[#allocation3] sm:$0x1]
    %s49 = smul.u32 0, 16
    %v50 = vstv %s49
    %v51 = vsub.s32 %v48, %v50
    %v52 = vlaneseq
    %v53 = vshrl.u32 %v52, 7
    %v54 = vadd.s32 %v53, 8
    %v55 = vperm.slane %v51, 0
    %vm56 = vcmp.eq.s32.totalorder %v53, %v55
    %vm57 = vcmp.eq.s32.totalorder %v54, %v55
    %v58 = vsel %vm56, 1, 0
    %v59 = vsel %vm57, 1, 0
    %v60 = vcvt.s32.f32 %v58
    %v61 = vcvt.s32.f32 %v59
    %v62 = vpack.c.bf16 %v61, %v60
    %v63 = vld [vmem:[#allocation2] sm:$0xff]
    %v64 = vld [vmem:[#allocation2 + $0x8] sm:$0xff]
    %v65 = vld [vmem:[#allocation6] sm:$0xf]
    %v66 = vld [vmem:[#allocation6 + $0x4] sm:$0xf]
    %v67 = vld [vmem:[#allocation6 + $0x8] sm:$0xf]
    %v68 = vld [vmem:[#allocation6 + $0xc] sm:$0xf]
    %v69 = vld [vmem:[#allocation6 + $0x10] sm:$0xf]
    %v70 = vld [vmem:[#allocation6 + $0x14] sm:$0xf]
    %v71 = vld [vmem:[#allocation6 + $0x18] sm:$0xf]
    %v72 = vld [vmem:[#allocation6 + $0x1c] sm:$0xf]
    %v73 = vld [vmem:[#allocation6 + $0x20] sm:$0xf]
    %v74 = vld [vmem:[#allocation6 + $0x24] sm:$0xf]
    %v75 = vld [vmem:[#allocation6 + $0x28] sm:$0xf]
    %v76 = vld [vmem:[#allocation6 + $0x2c] sm:$0xf]
    %v77 = vld [vmem:[#allocation6 + $0x30] sm:$0xf]
    %v78 = vld [vmem:[#allocation6 + $0x34] sm:$0xf]
    %v79 = vld [vmem:[#allocation6 + $0x38] sm:$0xf]
    %v80 = vld [vmem:[#allocation6 + $0x3c] sm:$0xf]
    %v97 = vunpack.c.l.b16 %v65
    %v98 = vunpack.c.l.b16 %v66
    %v99 = vunpack.c.l.b16 %v67
    %v100 = vunpack.c.l.b16 %v68
    %v101 = vunpack.c.l.b16 %v69
    %v102 = vunpack.c.l.b16 %v70
    %v103 = vunpack.c.l.b16 %v71
    %v104 = vunpack.c.l.b16 %v72
    %v105 = vunpack.c.l.b16 %v73
    %v106 = vunpack.c.l.b16 %v74
    %v107 = vunpack.c.l.b16 %v75
    %v108 = vunpack.c.l.b16 %v76
    %v109 = vunpack.c.l.b16 %v77
    %v110 = vunpack.c.l.b16 %v78
    %v111 = vunpack.c.l.b16 %v79
    %v112 = vunpack.c.l.b16 %v80
    %v113 = vpack.c.b16 %v98, %v97
    %v114 = vpack.c.b16 %v100, %v99
    %v115 = vpack.c.b16 %v102, %v101
    %v116 = vpack.c.b16 %v104, %v103
    %v117 = vpack.c.b16 %v106, %v105
    %v118 = vpack.c.b16 %v108, %v107
    %v119 = vpack.c.b16 %v110, %v109
    %v120 = vpack.c.b16 %v112, %v111
    %129 = vmatpush.bf16.msra.mxu0 %v120
    %130 = vmatpush.bf16.msra.mxu0 %v119
    %131 = vmatpush.bf16.msra.mxu0 %v118
    %132 = vmatpush.bf16.msra.mxu0 %v117
    %133 = vmatpush.bf16.msra.mxu0 %v116
    %134 = vmatpush.bf16.msra.mxu0 %v115
    %135 = vmatpush.bf16.msra.mxu0 %v114
    %136 = vmatpush.bf16.msra.mxu0 %v113
    %137 = vmatmul.bf16.gmra.mxu0 %v62
    %v138 = vpop.f32.mrf.mxu0
    %v139 = vadd.f32 0.0, %v138
    %v140 = vpop.f32.mrf.mxu0
    %v141 = vadd.f32 0.0, %v140
    %142 = vdwg.mxu0
    %v143 = vadd.f32 %v63, %v139
    %v144 = vadd.f32 %v64, %v141
    %145 = vst [vmem:[#allocation2] sm:$0xff] %v143
    %146 = vst [vmem:[#allocation2 + $0x8] sm:$0xff] %v144
    // Predicated region
    $region22: #{tpu_custom_call.1} parent=1 // pred_check
      %p147 = pneg %p42
    $region23: #{tpu_custom_call.1} parent=1 // pred_check_branch
      %149 = sbr.rel (%p147) target = $region25
    $region24: #{tpu_custom_call.1} parent=1 // pred_region
      %v150 = vld [vmem:[#allocation2] sm:$0xff]
      %v151 = vld [vmem:[#allocation2 + $0x8] sm:$0xff]
      %152 = vst [vmem:[#allocation8] sm:$0xff] %v150
      %153 = vst [vmem:[#allocation8 + $0x8] sm:$0xff] %v151
    $region25: #{tpu_custom_call.1} parent=1 // pred_fallthru
      _
    // Predicated region
    $region26: #{tpu_custom_call.1} parent=1 // pred_check
      _
    $region27: #{tpu_custom_call.1} parent=1 // pred_check_branch
      %155 = sbr.rel (0) target = $region29
    $region28: #{tpu_custom_call.1} parent=1 // pred_region
      %157 = vsyncadd [#allocation5], 0
      %s158 = sshll.u32 [#allocation8], 4
      %s159 = int_to_ptr.vmem [resolvable:$true] %s158
      %s160 = sshll.u32 %s2, 4
      %s161 = int_to_ptr.hbm [resolvable:$true] %s160
      %166 = dma.vmem_to_hbm [thread:$0]  %s159, 256, %s161, [#allocation5], 128, 128, 8
    $region29: #{tpu_custom_call.1} parent=1 // pred_fallthru
      _
    // Predicated region
    $region30: #{tpu_custom_call.1} parent=1 // pred_check
      _
    $region31: #{tpu_custom_call.1} parent=1 // pred_check_branch
      %168 = sbr.rel (0) target = $region33
    $region32: #{tpu_custom_call.1} parent=1 // pred_region
      %170 = dma.done [#allocation5], 256
    $region33: #{tpu_custom_call.1} parent=1 // pred_fallthru
      _
    %171 = vsyncpa [#allocation4], 1
    %172 = vsyncpa [#allocation7], 1
    %173 = vsyncpa [#allocation5], 1

</llo_original>
